<compile_context>
chip_gen: v5e
topology: v5e:2x2
jax: 0.10.0
libtpu: 0.0.40
codegen_flags: <defaults>
</compile_context>

<pallas_src>
import functools

import jax
import jax.numpy as jnp
from jax import lax
from jax.experimental import pallas as pl
from jax.experimental.pallas import tpu as pltpu


def _resident_gather_kernel(ids_ref, emb_ref, out_ref, rows_ref, *,
                            tokens_per_block, padded_seq_len):
    # ids_ref  : (B*L_pad,) int32 in SMEM (scalar-prefetched token ids)
    # emb_ref  : (V, H) embedding table, VMEM-resident (constant-index block)
    # out_ref  : (1, H, T) output tile, already in the final (B, H, L) layout
    # rows_ref : (T, H) VMEM scratch holding this tile's gathered rows
    b = pl.program_id(0)
    t = pl.program_id(1)
    base = b * padded_seq_len + t * tokens_per_block

    def gather_one(j, carry):
        rows_ref[j, :] = emb_ref[ids_ref[base + j], :]
        return carry

    lax.fori_loop(0, tokens_per_block, gather_one, 0,
                  unroll=min(tokens_per_block, 8))

    # (T, H) -> (H, T): rides the XLU; the store is lane-dense whenever T is a
    # multiple of 128 or equals the full (unpadded) sequence length.
    out_ref[0] = jnp.transpose(rows_ref[...], (1, 0))


def _hbm_gather_kernel(ids_ref, emb_hbm, out_ref, rows_ref, copy_sem, *,
                       tokens_per_block, padded_seq_len):
    # ids_ref  : (B*L_pad,) int32 in SMEM
    # emb_hbm  : (V, H) embedding table left in HBM (memory_space=pl.ANY)
    # out_ref  : (1, H, T) output tile in the final (B, H, L) layout
    # rows_ref : (T, H) VMEM landing buffer for the row gathers
    # copy_sem : single shared DMA semaphore (all row copies signal it)
    b = pl.program_id(0)
    t = pl.program_id(1)
    base = b * padded_seq_len + t * tokens_per_block

    def start_one(j, carry):
        row = ids_ref[base + j]                       # scalar read from SMEM
        pltpu.make_async_copy(emb_hbm.at[row],        # (H,) row in HBM
                              rows_ref.at[j],         # (H,) row in VMEM
                              copy_sem).start()
        return carry

    # Issue all T row gathers so they are in flight concurrently.
    lax.fori_loop(0, tokens_per_block, start_one, 0,
                  unroll=min(tokens_per_block, 8))

    def wait_one(j, carry):
        # Same-shaped descriptor; each wait retires one completed row copy.
        pltpu.make_async_copy(emb_hbm.at[0], rows_ref.at[0], copy_sem).wait()
        return carry

    # All copies must complete before the transpose-store (and before the body
    # returns, so the output-pipeline writeback never races the gather).
    lax.fori_loop(0, tokens_per_block, wait_one, 0,
                  unroll=min(tokens_per_block, 8))

    out_ref[0] = jnp.transpose(rows_ref[...], (1, 0))


def _dimension_semantics(num_axes):
    """CORE_PARALLEL on the leading grid axis on v7x (2 TCs/chip), else parallel."""
    try:
        kind = jax.devices()[0].device_kind.lower()
    except Exception:
        kind = ""
    if "v7" in kind and hasattr(pltpu, "CORE_PARALLEL"):
        return (pltpu.CORE_PARALLEL,) + (pltpu.PARALLEL,) * (num_axes - 1)
    return ("parallel",) * num_axes


def text_embedder_forward(ids, emb_weight, *, tokens_per_block=None,
                          force_hbm_gather=False,
                          resident_table_max_bytes=8 * 1024 * 1024):
    """Pallas implementation of TextEmbedderLMHead.forward (== encode).

    ids        : (B, L) integer token ids
    emb_weight : (V, H) embedding table (same layout as nn.Embedding.weight)
    returns    : (B, H, L) == word_embeddings(ids).transpose(-1, -2)
    """
    B, L = ids.shape
    V, H = emb_weight.shape

    # Token tile along the sequence axis.  <=256 tokens: one full-width tile
    # (block dims equal to the array dims need no (8,128) alignment); longer
    # sequences use 128-wide tiles so output stores stay lane-dense.
    if tokens_per_block is None:
        T = L if L <= 256 else 128
    else:
        T = int(tokens_per_block)
    L_pad = pl.cdiv(L, T) * T
    if L_pad // T > 1 and T % 128 != 0:
        raise ValueError("tokens_per_block must be a multiple of 128 when the "
                         "sequence is tiled (or cover the whole sequence).")

    # nn.Embedding raises on out-of-range ids; a raw gather would read an
    # arbitrary table row, so clamp defensively (deliberate semantic change).
    ids_i32 = jnp.clip(ids.astype(jnp.int32), 0, V - 1)
    if L_pad != L:
        ids_i32 = jnp.pad(ids_i32, ((0, 0), (0, L_pad - L)))  # pad with row 0
    ids_flat = ids_i32.reshape(B * L_pad)   # 1-D => minimal SMEM padding

    grid = (B, L_pad // T)
    out_shape = jax.ShapeDtypeStruct((B, H, L_pad), emb_weight.dtype)
    # Output written in the final (B, H, L) layout -- no wrapper transpose.
    out_spec = pl.BlockSpec((1, H, T), lambda b, t, ids_sref: (b, 0, t))

    table_bytes = V * H * emb_weight.dtype.itemsize
    use_resident = (not force_hbm_gather) and (table_bytes <= resident_table_max_bytes)

    if use_resident:
        # Small/medium tables: keep the whole table in VMEM (HBM read once)
        # and gather rows with dynamic in-kernel VMEM reads.
        kernel = functools.partial(_resident_gather_kernel,
                                   tokens_per_block=T, padded_seq_len=L_pad)
        grid_spec = pltpu.PrefetchScalarGridSpec(
            num_scalar_prefetch=1,                          # ids -> SMEM
            grid=grid,
            in_specs=[pl.BlockSpec((V, H), lambda b, t, ids_sref: (0, 0))],
            out_specs=out_spec,
            scratch_shapes=[pltpu.VMEM((T, H), emb_weight.dtype)],
        )
    else:
        # Large tables: table stays in HBM; T concurrent per-row DMAs per tile.
        kernel = functools.partial(_hbm_gather_kernel,
                                   tokens_per_block=T, padded_seq_len=L_pad)
        grid_spec = pltpu.PrefetchScalarGridSpec(
            num_scalar_prefetch=1,
            grid=grid,
            in_specs=[pl.BlockSpec(memory_space=pl.ANY)],   # table stays in HBM
            out_specs=out_spec,
            scratch_shapes=[
                pltpu.VMEM((T, H), emb_weight.dtype),       # gather landing tile
                pltpu.SemaphoreType.DMA,                    # one shared DMA sem
            ],
        )

    out = pl.pallas_call(
        kernel,
        out_shape=out_shape,
        grid_spec=grid_spec,
        compiler_params=pltpu.CompilerParams(
            dimension_semantics=_dimension_semantics(len(grid))),
    )(ids_flat, emb_weight)

    if L_pad != L:
        out = out[:, :, :L]
    return out


if __name__ == "__main__":
    # Small deterministic setup consistent with the module:
    #   vocab_size=128, hidden_size=32, sample_length=8, batch=2
    vocab_size, hidden_size, sample_length, batch = 128, 32, 8, 2

    key = jax.random.PRNGKey(0)
    k_emb, k_ids = jax.random.split(key, 2)

    # nn.Embedding default init ~ N(0, 1).  lm_head exists in __init__ but is
    # not used by forward(), so it is not materialized here.
    word_embeddings_weight = jax.random.normal(
        k_emb, (vocab_size, hidden_size), dtype=jnp.float32)
    ids = jax.random.randint(
        k_ids, (batch, sample_length), 0, vocab_size, dtype=jnp.int32)

    ref = jnp.transpose(word_embeddings_weight[ids], (0, 2, 1))

    # Resident-table fast path (the natural dispatch at these shapes).
    out_resident = jax.block_until_ready(
        text_embedder_forward(ids, word_embeddings_weight))
    assert out_resident.shape == (batch, hidden_size, sample_length)
    assert jnp.allclose(out_resident, ref, atol=1e-6, rtol=1e-6)

    # HBM DMA-gather path (used for large vocab*hidden); force it here so both
    # code paths are exercised and checked against the reference.
    out_hbm = jax.block_until_ready(
        text_embedder_forward(ids, word_embeddings_weight,
                              force_hbm_gather=True))
    assert out_hbm.shape == (batch, hidden_size, sample_length)
    assert jnp.allclose(out_hbm, ref, atol=1e-6, rtol=1e-6)

    print("KERNEL_OK")
</pallas_src>

<mosaic_0001>
module attributes {stable_mosaic.version = 11 : i64} {
  func.func @_resident_gather_kernel(%arg0: i32, %arg1: i32, %arg2: memref<16xi32, #tpu.memory_space<smem>>, %arg3: memref<128x32xf32, #tpu.memory_space<vmem>>, %arg4: memref<1x32x8xf32, #tpu.memory_space<vmem>>, %arg5: memref<8x32xf32, #tpu.memory_space<vmem>>) attributes {dimension_semantics = [#tpu.dimension_semantics<parallel>, #tpu.dimension_semantics<parallel>], iteration_bounds = array<i64: 2, 1>, scalar_prefetch = 1 : i64, scratch_operands = 1 : i64, tpu.core_type = #tpu.core_type<tc>, window_params = [{pipeline_mode = #tpu.pipeline_mode<synchronous>, transform_indices = @transform_0, window_bounds = array<i64: 128, 32>}, {transform_indices = @transform_1, window_bounds = array<i64: 1, 32, 8>}]} {
    %c8_i32 = arith.constant 8 : i32
    %0 = arith.muli %arg0, %c8_i32 : i32
    %c8_i32_0 = arith.constant 8 : i32
    %1 = arith.muli %arg1, %c8_i32_0 : i32
    %2 = arith.addi %0, %1 : i32
    %c0_i32 = arith.constant 0 : i32
    %3 = arith.addi %2, %c0_i32 : i32
    %4 = arith.index_cast %3 : i32 to index
    %5 = memref.load %arg2[%4] : memref<16xi32, #tpu.memory_space<smem>>
    %6 = arith.index_cast %5 : i32 to index
    %c0 = arith.constant 0 : index
    %7 = vector.load %arg3[%6, %c0] : memref<128x32xf32, #tpu.memory_space<vmem>>, vector<1x32xf32>
    %8 = vector.shape_cast %7 : vector<1x32xf32> to vector<32xf32>
    %9 = arith.index_cast %c0_i32 : i32 to index
    %c0_1 = arith.constant 0 : index
    %10 = vector.load %arg5[%9, %c0_1] : memref<8x32xf32, #tpu.memory_space<vmem>>, vector<1x32xf32>
    %11 = vector.shape_cast %10 : vector<1x32xf32> to vector<32xf32>
    %12 = vector.shape_cast %8 : vector<32xf32> to vector<1x32xf32>
    tpu.vector_store %arg5[%9, %c0_1], %12 {strides = array<i32>} : memref<8x32xf32, #tpu.memory_space<vmem>>, vector<1x32xf32>,
    %c1_i32 = arith.constant 1 : i32
    %13 = arith.addi %2, %c1_i32 : i32
    %14 = arith.index_cast %13 : i32 to index
    %15 = memref.load %arg2[%14] : memref<16xi32, #tpu.memory_space<smem>>
    %16 = arith.index_cast %15 : i32 to index
    %c0_2 = arith.constant 0 : index
    %17 = vector.load %arg3[%16, %c0_2] : memref<128x32xf32, #tpu.memory_space<vmem>>, vector<1x32xf32>
    %18 = vector.shape_cast %17 : vector<1x32xf32> to vector<32xf32>
    %19 = arith.index_cast %c1_i32 : i32 to index
    %c0_3 = arith.constant 0 : index
    %20 = vector.load %arg5[%19, %c0_3] : memref<8x32xf32, #tpu.memory_space<vmem>>, vector<1x32xf32>
    %21 = vector.shape_cast %20 : vector<1x32xf32> to vector<32xf32>
    %22 = vector.shape_cast %18 : vector<32xf32> to vector<1x32xf32>
    tpu.vector_store %arg5[%19, %c0_3], %22 {strides = array<i32>} : memref<8x32xf32, #tpu.memory_space<vmem>>, vector<1x32xf32>,
    %c2_i32 = arith.constant 2 : i32
    %23 = arith.addi %2, %c2_i32 : i32
    %24 = arith.index_cast %23 : i32 to index
    %25 = memref.load %arg2[%24] : memref<16xi32, #tpu.memory_space<smem>>
    %26 = arith.index_cast %25 : i32 to index
    %c0_4 = arith.constant 0 : index
    %27 = vector.load %arg3[%26, %c0_4] : memref<128x32xf32, #tpu.memory_space<vmem>>, vector<1x32xf32>
    %28 = vector.shape_cast %27 : vector<1x32xf32> to vector<32xf32>
    %29 = arith.index_cast %c2_i32 : i32 to index
    %c0_5 = arith.constant 0 : index
    %30 = vector.load %arg5[%29, %c0_5] : memref<8x32xf32, #tpu.memory_space<vmem>>, vector<1x32xf32>
    %31 = vector.shape_cast %30 : vector<1x32xf32> to vector<32xf32>
    %32 = vector.shape_cast %28 : vector<32xf32> to vector<1x32xf32>
    tpu.vector_store %arg5[%29, %c0_5], %32 {strides = array<i32>} : memref<8x32xf32, #tpu.memory_space<vmem>>, vector<1x32xf32>,
    %c3_i32 = arith.constant 3 : i32
    %33 = arith.addi %2, %c3_i32 : i32
    %34 = arith.index_cast %33 : i32 to index
    %35 = memref.load %arg2[%34] : memref<16xi32, #tpu.memory_space<smem>>
    %36 = arith.index_cast %35 : i32 to index
    %c0_6 = arith.constant 0 : index
    %37 = vector.load %arg3[%36, %c0_6] : memref<128x32xf32, #tpu.memory_space<vmem>>, vector<1x32xf32>
    %38 = vector.shape_cast %37 : vector<1x32xf32> to vector<32xf32>
    %39 = arith.index_cast %c3_i32 : i32 to index
    %c0_7 = arith.constant 0 : index
    %40 = vector.load %arg5[%39, %c0_7] : memref<8x32xf32, #tpu.memory_space<vmem>>, vector<1x32xf32>
    %41 = vector.shape_cast %40 : vector<1x32xf32> to vector<32xf32>
    %42 = vector.shape_cast %38 : vector<32xf32> to vector<1x32xf32>
    tpu.vector_store %arg5[%39, %c0_7], %42 {strides = array<i32>} : memref<8x32xf32, #tpu.memory_space<vmem>>, vector<1x32xf32>,
    %c4_i32 = arith.constant 4 : i32
    %43 = arith.addi %2, %c4_i32 : i32
    %44 = arith.index_cast %43 : i32 to index
    %45 = memref.load %arg2[%44] : memref<16xi32, #tpu.memory_space<smem>>
    %46 = arith.index_cast %45 : i32 to index
    %c0_8 = arith.constant 0 : index
    %47 = vector.load %arg3[%46, %c0_8] : memref<128x32xf32, #tpu.memory_space<vmem>>, vector<1x32xf32>
    %48 = vector.shape_cast %47 : vector<1x32xf32> to vector<32xf32>
    %49 = arith.index_cast %c4_i32 : i32 to index
    %c0_9 = arith.constant 0 : index
    %50 = vector.load %arg5[%49, %c0_9] : memref<8x32xf32, #tpu.memory_space<vmem>>, vector<1x32xf32>
    %51 = vector.shape_cast %50 : vector<1x32xf32> to vector<32xf32>
    %52 = vector.shape_cast %48 : vector<32xf32> to vector<1x32xf32>
    tpu.vector_store %arg5[%49, %c0_9], %52 {strides = array<i32>} : memref<8x32xf32, #tpu.memory_space<vmem>>, vector<1x32xf32>,
    %c5_i32 = arith.constant 5 : i32
    %53 = arith.addi %2, %c5_i32 : i32
    %54 = arith.index_cast %53 : i32 to index
    %55 = memref.load %arg2[%54] : memref<16xi32, #tpu.memory_space<smem>>
    %56 = arith.index_cast %55 : i32 to index
    %c0_10 = arith.constant 0 : index
    %57 = vector.load %arg3[%56, %c0_10] : memref<128x32xf32, #tpu.memory_space<vmem>>, vector<1x32xf32>
    %58 = vector.shape_cast %57 : vector<1x32xf32> to vector<32xf32>
    %59 = arith.index_cast %c5_i32 : i32 to index
    %c0_11 = arith.constant 0 : index
    %60 = vector.load %arg5[%59, %c0_11] : memref<8x32xf32, #tpu.memory_space<vmem>>, vector<1x32xf32>
    %61 = vector.shape_cast %60 : vector<1x32xf32> to vector<32xf32>
    %62 = vector.shape_cast %58 : vector<32xf32> to vector<1x32xf32>
    tpu.vector_store %arg5[%59, %c0_11], %62 {strides = array<i32>} : memref<8x32xf32, #tpu.memory_space<vmem>>, vector<1x32xf32>,
    %c6_i32 = arith.constant 6 : i32
    %63 = arith.addi %2, %c6_i32 : i32
    %64 = arith.index_cast %63 : i32 to index
    %65 = memref.load %arg2[%64] : memref<16xi32, #tpu.memory_space<smem>>
    %66 = arith.index_cast %65 : i32 to index
    %c0_12 = arith.constant 0 : index
    %67 = vector.load %arg3[%66, %c0_12] : memref<128x32xf32, #tpu.memory_space<vmem>>, vector<1x32xf32>
    %68 = vector.shape_cast %67 : vector<1x32xf32> to vector<32xf32>
    %69 = arith.index_cast %c6_i32 : i32 to index
    %c0_13 = arith.constant 0 : index
    %70 = vector.load %arg5[%69, %c0_13] : memref<8x32xf32, #tpu.memory_space<vmem>>, vector<1x32xf32>
    %71 = vector.shape_cast %70 : vector<1x32xf32> to vector<32xf32>
    %72 = vector.shape_cast %68 : vector<32xf32> to vector<1x32xf32>
    tpu.vector_store %arg5[%69, %c0_13], %72 {strides = array<i32>} : memref<8x32xf32, #tpu.memory_space<vmem>>, vector<1x32xf32>,
    %c7_i32 = arith.constant 7 : i32
    %73 = arith.addi %2, %c7_i32 : i32
    %74 = arith.index_cast %73 : i32 to index
    %75 = memref.load %arg2[%74] : memref<16xi32, #tpu.memory_space<smem>>
    %76 = arith.index_cast %75 : i32 to index
    %c0_14 = arith.constant 0 : index
    %77 = vector.load %arg3[%76, %c0_14] : memref<128x32xf32, #tpu.memory_space<vmem>>, vector<1x32xf32>
    %78 = vector.shape_cast %77 : vector<1x32xf32> to vector<32xf32>
    %79 = arith.index_cast %c7_i32 : i32 to index
    %c0_15 = arith.constant 0 : index
    %80 = vector.load %arg5[%79, %c0_15] : memref<8x32xf32, #tpu.memory_space<vmem>>, vector<1x32xf32>
    %81 = vector.shape_cast %80 : vector<1x32xf32> to vector<32xf32>
    %82 = vector.shape_cast %78 : vector<32xf32> to vector<1x32xf32>
    tpu.vector_store %arg5[%79, %c0_15], %82 {strides = array<i32>} : memref<8x32xf32, #tpu.memory_space<vmem>>, vector<1x32xf32>,
    %c8_i32_16 = arith.constant 8 : i32
    %c0_17 = arith.constant 0 : index
    %c0_18 = arith.constant 0 : index
    %83 = vector.load %arg5[%c0_17, %c0_18] : memref<8x32xf32, #tpu.memory_space<vmem>>, vector<8x32xf32>
    %84 = tpu.transpose %83, [1, 0] : vector<8x32xf32> -> vector<32x8xf32>
    %c0_19 = arith.constant 0 : index
    %c0_20 = arith.constant 0 : index
    %c0_21 = arith.constant 0 : index
    %85 = vector.load %arg4[%c0_19, %c0_20, %c0_21] : memref<1x32x8xf32, #tpu.memory_space<vmem>>, vector<1x32x8xf32>
    %86 = vector.shape_cast %85 : vector<1x32x8xf32> to vector<32x8xf32>
    %87 = vector.shape_cast %84 : vector<32x8xf32> to vector<1x32x8xf32>
    tpu.vector_store %arg4[%c0_19, %c0_20, %c0_21], %87 {strides = array<i32>} : memref<1x32x8xf32, #tpu.memory_space<vmem>>, vector<1x32x8xf32>,
    return
  }
  func.func @transform_0(%arg0: i32, %arg1: i32, %arg2: memref<16xi32, #tpu.memory_space<smem>>) -> (i32, i32) {
    %c0_i32 = arith.constant 0 : i32
    %c0_i32_0 = arith.constant 0 : i32
    %c0_i32_1 = arith.constant 0 : i32
    return %c0_i32, %c0_i32_0 : i32, i32
  }
  func.func @transform_1(%arg0: i32, %arg1: i32, %arg2: memref<16xi32, #tpu.memory_space<smem>>) -> (i32, i32, i32) {
    %c0_i32 = arith.constant 0 : i32
    %c0_i32_0 = arith.constant 0 : i32
    return %arg0, %c0_i32, %arg1 : i32, i32, i32
  }
}

</mosaic_0001>

<llo_original>
// kernel: tpu_custom_call.1
$region0: #{tpu_custom_call.1}
  #allocation0 [shape = 'u32[]', space=smem, size = 0x4, offset = 0x4, fixed_abs, tag = 'smem constant byte address 0x4 - core index']
  #allocation1 [shape = 'u32[72,128]{1,0:T(1,128)}', space=vmem, size = 0x9000, scoped, tag = 'internal scratch']
  #allocation2 [shape = 'f32[8,32]{1,0:T(8,128)}', space=vmem, size = 0x1000, scoped, tag = 'scratch operand']
  #allocation3 [shape = 's32[1]{0}', space=sflag, size = 0x4, scoped, tag = 'scoped memory for tpu_custom_call.1']
  #allocation4 [shape = 'u8[512]{0}', space=smem, size = 0x200, scoped, tag = 'prefetched SMEM operand 0']
  %s0 = inlined_call_operand.vmem [shape: s32[16], index: 0, kind: input, shape index: {}]
  %s1 = inlined_call_operand.vmem [shape: f32[128,32], index: 1, kind: input, shape index: {}]
  %s2 = inlined_call_operand.vmem [shape: f32[2,32,8], index: 2, kind: output, shape index: {}]
  %s3 = sld [smem:[#allocation0]]
  $region37: #{tpu_custom_call.1} parent=0
    _
  %s5 = ssub.s32 1, %s3
  %s6 = scalar_select 0, %s5, %s3
  %s8 = sshll.u32 %s0, 4
  %s9 = int_to_ptr.vmem [resolvable:$true] %s8
  %11 = dma.vmem_to_smem %s9, 16, [#allocation4], [#allocation3]
  %13 = dma.done [#allocation3], 16
  %14 = sfence
  loop: start=0, step=1, limit=4
  $region2: #{tpu_custom_call.1} parent=0 // loop_pre_header
    _
  $region3: #{tpu_custom_call.1} parent=0 // loop_header
    %s16 = sphi 0, %s20
    %p17 = scmp.ge.s32.totalorder %s16, 4
    %s23 = sphi 0, %s35
    %s24 = sphi 0, %s31
    %s25 = sphi 0, %s23
    %s26 = sphi 0, %s24
    %s27 = sphi 0, %s25
    %s28 = sphi 0, %s26
    %s36 = sphi 0, %s36
    %s38 = sphi 0, %s36
    %s39 = sphi 0, %s38
    %s53 = sphi 0, %s39
    %s61 = sphi 0, %s63
    %s64 = sphi 0, %s61
    %s65 = sphi 0, %s64
    %s81 = sphi 0, %s65
  $region4: #{tpu_custom_call.1} parent=0 // loop_header_branch
    %19 = sbr.rel (%p17) target = $region8
  $region5: #{tpu_custom_call.1} parent=0 // loop_body
    %s21 = ssub.s32 %s16, 1
    %s22 = ssub.s32 %s16, 2
    %s29 = sadd.s32 1, %s24
    %p30 = scmp.ge.s32.totalorder %s29, 1
    %s31 = scalar_select %p30, 0, %s29
    %s32 = sadd.s32 1, %s23
    %s33 = scalar_select %p30, %s32, %s23
    %p34 = scmp.ge.s32.totalorder %s33, 2
    %s35 = scalar_select %p34, 0, %s33
    %s37 = sadd.s32 %s36, 1
    %p40 = scmp.eq.s32.totalorder %s16, 1
    %p41 = scmp.ne.s32.totalorder %s36, %s38
    %p42 = scmp.eq.s32.totalorder %s16, 0
    %p43 = por %p41, %p42
    %p44 = scmp.ne.s32.totalorder %s36, %s38
    %p45 = scmp.eq.s32.totalorder %s21, 1
    %p46 = por %p44, %p45
    %p47 = scmp.ne.s32.totalorder %s38, %s39
    %p48 = scmp.eq.s32.totalorder %s21, 0
    %p49 = por %p47, %p48
    %p50 = scmp.ne.s32.totalorder %s38, %s39
    %p51 = scmp.eq.s32.totalorder %s22, 1
    %p52 = por %p50, %p51
    %p54 = scmp.ne.s32.totalorder %s39, %s53
    %p55 = scmp.eq.s32.totalorder %s22, 0
    %p56 = por %p54, %p55
    %s57 = ssub.s32 %s23, %s35
    %s58 = ssub.s32 %s24, %s31
    %s59 = sor.u32 %s57, %s58
    %p60 = scmp.eq.s32.totalorder %s59, 0
    %s62 = sadd.s32 %s61, 1
    %s63 = scalar_select %p60, %s61, %s62
    %p66 = pneg %p60
    %p67 = scmp.eq.s32.totalorder %s16, 1
    %p68 = por %p66, %p67
    %p69 = scmp.ne.s32.totalorder %s61, %s64
    %p70 = scmp.eq.s32.totalorder %s16, 0
    %p71 = por %p69, %p70
    %p72 = scmp.ne.s32.totalorder %s61, %s64
    %p73 = scmp.eq.s32.totalorder %s21, 1
    %p74 = por %p72, %p73
    %p75 = scmp.ne.s32.totalorder %s64, %s65
    %p76 = scmp.eq.s32.totalorder %s21, 0
    %p77 = por %p75, %p76
    %p78 = scmp.ne.s32.totalorder %s64, %s65
    %p79 = scmp.eq.s32.totalorder %s22, 1
    %p80 = por %p78, %p79
    %p82 = scmp.ne.s32.totalorder %s65, %s81
    %p83 = scmp.eq.s32.totalorder %s22, 0
    %p84 = por %p82, %p83
    %p85 = scmp.le.s32.totalorder 1, %s16
    %p86 = scmp.lt.s32.totalorder %s16, 3
    %p87 = pnand %p85, %p86
    %p88 = pneg %p87
    // Predicated region
    $region9: #{tpu_custom_call.1} parent=5 // pred_check
      _
    $region10: #{tpu_custom_call.1} parent=5 // pred_check_branch
      %90 = sbr.rel (%p87) target = $region12
    $region11: #{tpu_custom_call.1} parent=5 // pred_region
      %s91 = ssub.s32 %s16, 1
      // Predicated region
      $region13: #{tpu_custom_call.1} parent=11 // pred_check
        %p92 = pneg %p49
      $region14: #{tpu_custom_call.1} parent=11 // pred_check_branch
        %94 = sbr.rel (%p92) target = $region16
      $region15: #{tpu_custom_call.1} parent=11 // pred_region
        _
      $region16: #{tpu_custom_call.1} parent=11 // pred_fallthru
        _
    $region12: #{tpu_custom_call.1} parent=5 // pred_fallthru
      _
    %p95 = scmp.lt.s32.totalorder %s16, 2
    // Predicated region
    $region17: #{tpu_custom_call.1} parent=5 // pred_check
      %p96 = pneg %p95
    $region18: #{tpu_custom_call.1} parent=5 // pred_check_branch
      %98 = sbr.rel (%p96) target = $region20
    $region19: #{tpu_custom_call.1} parent=5 // pred_region
      _
    $region20: #{tpu_custom_call.1} parent=5 // pred_fallthru
      _
    %p99 = scmp.le.s32.totalorder 1, %s16
    %p100 = scmp.lt.s32.totalorder %s16, 3
    %p101 = pnand %p99, %p100
    %p102 = pneg %p101
    // Predicated region
    $region21: #{tpu_custom_call.1} parent=5 // pred_check
      _
    $region22: #{tpu_custom_call.1} parent=5 // pred_check_branch
      %104 = sbr.rel (%p101) target = $region24
    $region23: #{tpu_custom_call.1} parent=5 // pred_region
      %s105 = ssub.s32 %s16, 1
      %p106 = pneg %p49
      %p107 = pneg %p46
      %p108 = pneg %p77
      %p109 = pneg %p74
      %p110 = scmp.lt.s32.totalorder %s25, 1
      %s111 = scalar_select %p110, %s25, 1
      %p112 = scmp.lt.s32.totalorder %s26, 0
      %s113 = scalar_select %p112, %s26, 0
      %s114 = smul.addr %s111, 4
      %s115 = sadd.s32 %s113, %s114
      %s116 = smul.addr %s115, 8
      %s117 = scalar_lea.vmem %s2, %s116
      %p118 = scmp.lt.s32.totalorder %s25, 1
      %s119 = scalar_select %p118, %s25, 1
      %p120 = scmp.lt.s32.totalorder %s26, 0
      %s121 = scalar_select %p120, %s26, 0
      %s122 = smul.addr %s119, 4
      %s123 = sadd.s32 %s121, %s122
      %s124 = smul.addr %s123, 8
      %s125 = scalar_lea.vmem %s2, %s124
      %s126 = smul.u32 %s25, 8
      %s127 = smul.u32 %s26, 8
      %s128 = sadd.s32 %s126, %s127
      %s129 = sld [smem:[#allocation4 + %s128]]
      %s130 = scalar_lea.vmem %s1, %s129
      %v131 = vld [vmem:[%s130] sm:$0x1]
      %vm132 = vcmask 253952
      %133 = vst.msk [vmem:[#allocation2] sm:$0x1] %vm132, %v131
      %s134 = sadd.s32 %s128, 1
      %s135 = sld [smem:[#allocation4 + %s134]]
      %s136 = scalar_lea.vmem %s1, %s135
      %v137 = vld [vmem:[%s136] sm:$0x1]
      %138 = vst.msk [vmem:[#allocation2 + $0x1] sm:$0x1] %vm132, %v137
      %s139 = sadd.s32 %s128, 2
      %s140 = sld [smem:[#allocation4 + %s139]]
      %s141 = scalar_lea.vmem %s1, %s140
      %v142 = vld [vmem:[%s141] sm:$0x1]
      %143 = vst.msk [vmem:[#allocation2 + $0x2] sm:$0x1] %vm132, %v142
      %s144 = sadd.s32 %s128, 3
      %s145 = sld [smem:[#allocation4 + %s144]]
      %s146 = scalar_lea.vmem %s1, %s145
      %v147 = vld [vmem:[%s146] sm:$0x1]
      %148 = vst.msk [vmem:[#allocation2 + $0x3] sm:$0x1] %vm132, %v147
      %s149 = sadd.s32 %s128, 4
      %s150 = sld [smem:[#allocation4 + %s149]]
      %s151 = scalar_lea.vmem %s1, %s150
      %v152 = vld [vmem:[%s151] sm:$0x1]
      %153 = vst.msk [vmem:[#allocation2 + $0x4] sm:$0x1] %vm132, %v152
      %s154 = sadd.s32 %s128, 5
      %s155 = sld [smem:[#allocation4 + %s154]]
      %s156 = scalar_lea.vmem %s1, %s155
      %v157 = vld [vmem:[%s156] sm:$0x1]
      %158 = vst.msk [vmem:[#allocation2 + $0x5] sm:$0x1] %vm132, %v157
      %s159 = sadd.s32 %s128, 6
      %s160 = sld [smem:[#allocation4 + %s159]]
      %s161 = scalar_lea.vmem %s1, %s160
      %v162 = vld [vmem:[%s161] sm:$0x1]
      %163 = vst.msk [vmem:[#allocation2 + $0x6] sm:$0x1] %vm132, %v162
      %s164 = sadd.s32 %s128, 7
      %s165 = sld [smem:[#allocation4 + %s164]]
      %s166 = scalar_lea.vmem %s1, %s165
      %v167 = vld [vmem:[%s166] sm:$0x1]
      %168 = vst.msk [vmem:[#allocation2 + $0x7] sm:$0x1] %vm132, %v167
      %v169 = vld [vmem:[#allocation2] sm:$0xff]
      %170 = vxpose.xlu0.b32.start [1/16] %v169, 128
      %171 = vxpose.xlu0.b32.cont [2/16] 0.0, 128
      %172 = vxpose.xlu0.b32.cont [3/16] 0.0, 128
      %173 = vxpose.xlu0.b32.cont [4/16] 0.0, 128
      %174 = vxpose.xlu0.b32.cont [5/16] 0.0, 128
      %175 = vxpose.xlu0.b32.cont [6/16] 0.0, 128
      %176 = vxpose.xlu0.b32.cont [7/16] 0.0, 128
      %177 = vxpose.xlu0.b32.cont [8/16] 0.0, 128
      %178 = vxpose.xlu0.b32.cont [9/16] 0.0, 128
      %179 = vxpose.xlu0.b32.cont [10/16] 0.0, 128
      %180 = vxpose.xlu0.b32.cont [11/16] 0.0, 128
      %181 = vxpose.xlu0.b32.cont [12/16] 0.0, 128
      %182 = vxpose.xlu0.b32.cont [13/16] 0.0, 128
      %183 = vxpose.xlu0.b32.cont [14/16] 0.0, 128
      %184 = vxpose.xlu0.b32.cont [15/16] 0.0, 128
      %185 = vxpose.xlu0.b32.end [16/16] 0.0, 128
      %v186 = vpop.trf.xlu0
      %v187 = vpop.trf.xlu0
      %v188 = vpop.trf.xlu0
      %v189 = vpop.trf.xlu0
      %v190 = vpop.trf.xlu0
      %v191 = vpop.trf.xlu0
      %v192 = vpop.trf.xlu0
      %v193 = vpop.trf.xlu0
      %v194 = vpop.trf.xlu0
      %v195 = vpop.trf.xlu0
      %v196 = vpop.trf.xlu0
      %v197 = vpop.trf.xlu0
      %v198 = vpop.trf.xlu0
      %v199 = vpop.trf.xlu0
      %v200 = vpop.trf.xlu0
      %v201 = vpop.trf.xlu0
      %vm202 = vcmask 64512
      %203 = vst.msk [vmem:[%s125] sm:$0xff] %vm202, %v186
      %204 = vst.msk [vmem:[%s125 + $0x8] sm:$0xff] %vm202, %v187
      %205 = vst.msk [vmem:[%s125 + $0x10] sm:$0xff] %vm202, %v188
      %206 = vst.msk [vmem:[%s125 + $0x18] sm:$0xff] %vm202, %v189
      %p207 = scmp.lt.s32.totalorder %s25, 1
      %s208 = scalar_select %p207, %s25, 1
      %p209 = scmp.lt.s32.totalorder %s26, 0
      %s210 = scalar_select %p209, %s26, 0
      %s211 = smul.addr %s208, 4
      %s212 = sadd.s32 %s210, %s211
      %s213 = smul.addr %s212, 8
      %s214 = scalar_lea.vmem %s2, %s213
      // Predicated region
      $region25: #{tpu_custom_call.1} parent=23 // pred_check
        %p215 = pneg %p74
      $region26: #{tpu_custom_call.1} parent=23 // pred_check_branch
        %217 = sbr.rel (%p215) target = $region28
      $region27: #{tpu_custom_call.1} parent=23 // pred_region
        _
      $region28: #{tpu_custom_call.1} parent=23 // pred_fallthru
        _
    $region24: #{tpu_custom_call.1} parent=5 // pred_fallthru
      _
    %p218 = scmp.le.s32.totalorder 2, %s16
    // Predicated region
    $region29: #{tpu_custom_call.1} parent=5 // pred_check
      %p219 = pneg %p218
    $region30: #{tpu_custom_call.1} parent=5 // pred_check_branch
      %221 = sbr.rel (%p219) target = $region32
    $region31: #{tpu_custom_call.1} parent=5 // pred_region
      %s222 = ssub.s32 %s16, 2
      // Predicated region
      $region33: #{tpu_custom_call.1} parent=31 // pred_check
        %p223 = pneg %p80
      $region34: #{tpu_custom_call.1} parent=31 // pred_check_branch
        %225 = sbr.rel (%p223) target = $region36
      $region35: #{tpu_custom_call.1} parent=31 // pred_region
        %p226 = scmp.lt.s32.totalorder %s27, 1
        %s227 = scalar_select %p226, %s27, 1
        %p228 = scmp.lt.s32.totalorder %s28, 0
        %s229 = scalar_select %p228, %s28, 0
        %s230 = smul.addr %s227, 4
        %s231 = sadd.s32 %s229, %s230
        %s232 = smul.addr %s231, 8
        %s233 = scalar_lea.vmem %s2, %s232
      $region36: #{tpu_custom_call.1} parent=31 // pred_fallthru
        _
    $region32: #{tpu_custom_call.1} parent=5 // pred_fallthru
      _
  $region6: #{tpu_custom_call.1} parent=0 // loop_footer
    %s20 = sadd.s32 1, %s16
  $region7: #{tpu_custom_call.1} parent=0 // loop_footer_branch
    %15 = sbr.rel target = $region3
  $region8: #{tpu_custom_call.1} parent=0 // loop_exit
    _

</llo_original>
